<compile_context>
chip_gen: v7x
topology: tpu7x:2x2x1
jax: 0.10.0
libtpu: 0.0.40
codegen_flags: <defaults>
</compile_context>

<pallas_src>
import functools

import jax
import jax.numpy as jnp
from jax.experimental import pallas as pl
from jax.experimental.pallas import tpu as pltpu

GAMMA = 2.0        # module default; specialized to an explicit square below
ALPHA = 0.063784   # alpha table = [alpha, 1 - alpha], gathered by target

LANE = 128
MAX_TILE_ROWS = 2048   # 2048x128 px tile ~= 2 MiB f32 logits; double-buffered
                       # inputs stay well inside v5e's 16 MiB scoped VMEM.

# TODO(synk): kernel is specialized to C == 2 (binary focal loss); the module's
# alpha table only has 2 entries so targets are {0, 1} anyway.


def _round_up(x, m):
    return ((x + m - 1) // m) * m


def _focal_loss_kernel(t_ref, x_ref, out_ref, *, grid_j, tile_rows, hw,
                       needs_mask):
    # t_ref:   (1, T, 128) integer targets (int8 preferred, any int dtype OK)
    # x_ref:   (1, 2, T, 128) logits (f32 or bf16)
    # out_ref: (1, 8, 128) f32, this step's partial loss sum broadcast to a vreg
    x0 = x_ref[0, 0].astype(jnp.float32)          # (T, 128) logits of class 0
    x1 = x_ref[0, 1].astype(jnp.float32)          # (T, 128) logits of class 1
    t = t_ref[0].astype(jnp.int32)                # widen in-register (free-ish)
    is1 = t == 1

    # Margin of the non-target class over the target class.
    z = jnp.where(is1, x0 - x1, x1 - x0)
    # logpt = log_softmax at the target class = -softplus(z), stable form.
    # (log(1 + e) == log1p(e) to ~1e-7 here since e is in (0, 1].)
    e = jnp.exp(-jnp.abs(z))
    logpt = -(jnp.maximum(z, 0.0) + jnp.log(1.0 + e))
    # 1 - pt = sigmoid(z), rebuilt from the same exp (no second exp); the
    # approximate reciprocal rides the otherwise-idle EUP slot.
    one_minus_pt = jnp.where(z >= 0.0, 1.0, e) * pl.reciprocal(1.0 + e,
                                                               approx=True)

    at = jnp.where(is1, 1.0 - ALPHA, ALPHA)
    # gamma == 2 -> explicit square (no float pow -> no extra exp/log).
    loss = -(one_minus_pt * one_minus_pt) * (logpt * at)

    if needs_mask:
        # Mask pixels past the true H*W: covers the lane-tail padding and any
        # out-of-bounds rows of a ragged last row-tile.  hw / grid_j /
        # tile_rows are compile-time constants baked into the kernel.
        s = pl.program_id(0)
        j = 0 if grid_j == 1 else s % grid_j
        row = jax.lax.broadcasted_iota(jnp.int32, (tile_rows, LANE), 0)
        lane = jax.lax.broadcasted_iota(jnp.int32, (tile_rows, LANE), 1)
        pix = (j * tile_rows + row) * LANE + lane
        loss = jnp.where(pix < hw, loss, 0.0)

    out_ref[...] = jnp.broadcast_to(jnp.sum(loss), (1, 8, LANE))


def focal_loss(target, logits, size_average=True):
    """target: (N, H, W) ints in {0, 1};  logits: (N, C, H, W), C == 2."""
    N, C, H, W = logits.shape
    assert C == 2, "binary focal loss kernel requires C == 2"
    HW = H * W

    x = logits.reshape(N, C, HW)                  # contiguous views, no copies
    t = target.reshape(N, HW)
    if not jnp.issubdtype(t.dtype, jnp.integer):
        t = t.astype(jnp.int32)

    HW_pad = _round_up(HW, LANE)
    if HW_pad != HW:
        # Rare ragged case: pad only to the next lane multiple (<= 127 px).
        # TODO(synk): this still materializes one extra copy of the inputs;
        # lane-aligned H*W takes the zero-copy path above.
        x = jnp.pad(x, ((0, 0), (0, 0), (0, HW_pad - HW)))
        t = jnp.pad(t, ((0, 0), (0, HW_pad - HW)))
    rows = HW_pad // LANE
    x = x.reshape(N, C, rows, LANE)
    t = t.reshape(N, rows, LANE)

    if rows <= MAX_TILE_ROWS:
        tile_rows = rows                          # whole image per grid step
    else:
        # Near-even split into row-tiles (multiple of 32 for int8 targets),
        # so the last tile carries almost no padding.
        nblk = pl.cdiv(rows, MAX_TILE_ROWS)
        tile_rows = _round_up(pl.cdiv(rows, nblk), 32)
    grid_j = pl.cdiv(rows, tile_rows)
    steps = N * grid_j
    needs_mask = (HW_pad != HW) or (rows % tile_rows != 0)

    if grid_j == 1:
        t_map = lambda s: (s, 0, 0)
        x_map = lambda s: (s, 0, 0, 0)
    else:
        t_map = lambda s: (s // grid_j, s % grid_j, 0)
        x_map = lambda s: (s // grid_j, 0, s % grid_j, 0)

    kernel = functools.partial(
        _focal_loss_kernel, grid_j=grid_j, tile_rows=tile_rows, hw=HW,
        needs_mask=needs_mask)

    per_step = pl.pallas_call(
        kernel,
        out_shape=jax.ShapeDtypeStruct((steps, 8, LANE), jnp.float32),
        grid=(steps,),
        in_specs=[
            pl.BlockSpec((1, tile_rows, LANE), t_map),
            pl.BlockSpec((1, C, tile_rows, LANE), x_map),
        ],
        out_specs=pl.BlockSpec((1, 8, LANE), lambda s: (s, 0, 0)),
        compiler_params=pltpu.CompilerParams(
            dimension_semantics=("parallel",)),
    )(t, x)

    total = jnp.sum(per_step[:, 0, 0])
    if size_average:
        return total / jnp.float32(N * HW)
    return total


def _focal_loss_ref(target, logits, size_average=True):
    """Pure-JAX reference mirroring the PyTorch module."""
    N, C, H, W = logits.shape
    x2d = jnp.transpose(logits.reshape(N, C, H * W), (0, 2, 1)).reshape(-1, C)
    t = target.reshape(-1).astype(jnp.int32)
    logp = jax.nn.log_softmax(x2d.astype(jnp.float32), axis=1)
    logpt = jnp.take_along_axis(logp, t[:, None], axis=1)[:, 0]
    pt = jnp.exp(logpt)
    alpha_vec = jnp.array([ALPHA, 1.0 - ALPHA], jnp.float32)
    at = alpha_vec[t]
    loss = -1.0 * (1.0 - pt) ** GAMMA * (logpt * at)
    return loss.mean() if size_average else loss.sum()


if __name__ == "__main__":
    key = jax.random.PRNGKey(0)
    k1, k2, k3, k4 = jax.random.split(key, 4)

    # Lane-aligned case (H*W % 128 == 0): zero-copy wrapper path.
    N, C, H, W = 2, 2, 16, 16          # binary classes (alpha table has 2 entries)
    logits = jax.random.normal(k1, (N, C, H, W), dtype=jnp.float32)
    target = jax.random.randint(k2, (N, H, W), 0, 2, dtype=jnp.int32).astype(jnp.int8)

    out = jax.block_until_ready(focal_loss(target, logits))
    ref = _focal_loss_ref(target, logits)
    assert jnp.isfinite(out), "non-finite loss"
    assert jnp.allclose(out, ref, rtol=2e-3, atol=1e-6), (out, ref)

    out_sum = jax.block_until_ready(focal_loss(target, logits, size_average=False))
    ref_sum = _focal_loss_ref(target, logits, size_average=False)
    assert jnp.allclose(out_sum, ref_sum, rtol=2e-3, atol=1e-5), (out_sum, ref_sum)

    # Ragged case (H*W % 128 != 0): exercises the in-kernel pixel-index mask.
    N2, H2, W2 = 2, 10, 13
    logits2 = jax.random.normal(k3, (N2, C, H2, W2), dtype=jnp.float32)
    target2 = jax.random.randint(k4, (N2, H2, W2), 0, 2, dtype=jnp.int32).astype(jnp.int8)
    out2 = jax.block_until_ready(focal_loss(target2, logits2))
    ref2 = _focal_loss_ref(target2, logits2)
    assert jnp.isfinite(out2), "non-finite loss (ragged)"
    assert jnp.allclose(out2, ref2, rtol=2e-3, atol=1e-6), (out2, ref2)

    print("KERNEL_OK")
</pallas_src>

<mosaic_0001>
module attributes {stable_mosaic.version = 11 : i64} {
  func.func @_focal_loss_kernel(%arg0: i32, %arg1: memref<1x2x128xi8, #tpu.memory_space<vmem>>, %arg2: memref<1x2x2x128xf32, #tpu.memory_space<vmem>>, %arg3: memref<1x8x128xf32, #tpu.memory_space<vmem>>) attributes {dimension_semantics = [#tpu.dimension_semantics<parallel>], iteration_bounds = array<i64: 2>, scalar_prefetch = 0 : i64, scratch_operands = 0 : i64, tpu.core_type = #tpu.core_type<tc>, window_params = [{transform_indices = @transform_0, window_bounds = array<i64: 1, 2, 128>}, {transform_indices = @transform_1, window_bounds = array<i64: 1, 2, 2, 128>}, {transform_indices = @transform_2, window_bounds = array<i64: 1, 8, 128>}]} {
    %c0 = arith.constant 0 : index
    %c0_0 = arith.constant 0 : index
    %c0_1 = arith.constant 0 : index
    %c0_2 = arith.constant 0 : index
    %0 = vector.load %arg2[%c0, %c0_0, %c0_1, %c0_2] : memref<1x2x2x128xf32, #tpu.memory_space<vmem>>, vector<1x1x2x128xf32>
    %1 = vector.shape_cast %0 : vector<1x1x2x128xf32> to vector<2x128xf32>
    %c0_3 = arith.constant 0 : index
    %c1 = arith.constant 1 : index
    %c0_4 = arith.constant 0 : index
    %c0_5 = arith.constant 0 : index
    %2 = vector.load %arg2[%c0_3, %c1, %c0_4, %c0_5] : memref<1x2x2x128xf32, #tpu.memory_space<vmem>>, vector<1x1x2x128xf32>
    %3 = vector.shape_cast %2 : vector<1x1x2x128xf32> to vector<2x128xf32>
    %c0_6 = arith.constant 0 : index
    %c0_7 = arith.constant 0 : index
    %c0_8 = arith.constant 0 : index
    %4 = vector.load %arg1[%c0_6, %c0_7, %c0_8] : memref<1x2x128xi8, #tpu.memory_space<vmem>>, vector<1x2x128xi8>
    %5 = vector.shape_cast %4 : vector<1x2x128xi8> to vector<2x128xi8>
    %6 = arith.extsi %5 : vector<2x128xi8> to vector<2x128xi32>
    %c1_i32 = arith.constant 1 : i32
    %7 = vector.broadcast %c1_i32 : i32 to vector<2x128xi32>
    %8 = arith.cmpi eq, %6, %7 : vector<2x128xi32>
    %9 = arith.subf %1, %3 : vector<2x128xf32>
    %10 = arith.subf %3, %1 : vector<2x128xf32>
    %11 = arith.select %8, %9, %10 : vector<2x128xi1>, vector<2x128xf32>
    %12 = math.absf %11 : vector<2x128xf32>
    %cst = arith.constant 0.000000e+00 : f32
    %13 = vector.broadcast %cst : f32 to vector<2x128xf32>
    %14 = arith.subf %13, %12 : vector<2x128xf32>
    %15 = math.exp %14 : vector<2x128xf32>
    %cst_9 = arith.constant 0.000000e+00 : f32
    %16 = vector.broadcast %cst_9 : f32 to vector<2x128xf32>
    %17 = arith.maximumf %11, %16 : vector<2x128xf32>
    %cst_10 = arith.constant 1.000000e+00 : f32
    %18 = vector.broadcast %cst_10 : f32 to vector<2x128xf32>
    %19 = arith.addf %18, %15 : vector<2x128xf32>
    %20 = math.log %19 : vector<2x128xf32>
    %21 = arith.addf %17, %20 : vector<2x128xf32>
    %cst_11 = arith.constant 0.000000e+00 : f32
    %22 = vector.broadcast %cst_11 : f32 to vector<2x128xf32>
    %23 = arith.subf %22, %21 : vector<2x128xf32>
    %cst_12 = arith.constant 0.000000e+00 : f32
    %24 = vector.broadcast %cst_12 : f32 to vector<2x128xf32>
    %25 = arith.cmpf oge, %11, %24 : vector<2x128xf32>
    %cst_13 = arith.constant 1.000000e+00 : f32
    %26 = vector.broadcast %cst_13 : f32 to vector<2x128xf32>
    %27 = arith.select %25, %26, %15 : vector<2x128xi1>, vector<2x128xf32>
    %cst_14 = arith.constant 1.000000e+00 : f32
    %28 = vector.broadcast %cst_14 : f32 to vector<2x128xf32>
    %29 = arith.addf %28, %15 : vector<2x128xf32>
    %30 = tpu.reciprocal %29 {approx = true} : vector<2x128xf32> -> vector<2x128xf32>
    %31 = arith.mulf %27, %30 : vector<2x128xf32>
    %cst_15 = arith.constant 0.936215996 : f32
    %cst_16 = arith.constant 6.378400e-02 : f32
    %32 = vector.broadcast %cst_15 : f32 to vector<2x128xf32>
    %33 = vector.broadcast %cst_16 : f32 to vector<2x128xf32>
    %34 = arith.select %8, %32, %33 : vector<2x128xi1>, vector<2x128xf32>
    %35 = arith.mulf %31, %31 : vector<2x128xf32>
    %cst_17 = arith.constant 0.000000e+00 : f32
    %36 = vector.broadcast %cst_17 : f32 to vector<2x128xf32>
    %37 = arith.subf %36, %35 : vector<2x128xf32>
    %38 = arith.mulf %23, %34 : vector<2x128xf32>
    %39 = arith.mulf %37, %38 : vector<2x128xf32>
    %40 = vector.shape_cast %39 : vector<2x128xf32> to vector<1x2x128xf32>
    %cst_18 = arith.constant dense<0.000000e+00> : vector<1xf32>
    %41 = vector.multi_reduction <add>, %40, %cst_18 [1, 2] : vector<1x2x128xf32> to vector<1xf32>
    %42 = vector.shape_cast %41 : vector<1xf32> to vector<1x1x1xf32>
    %43 = vector.extract %42[0, 0, 0] : f32 from vector<1x1x1xf32>
    %44 = vector.broadcast %43 : f32 to vector<1x8x128xf32>
    %c0_19 = arith.constant 0 : index
    %c0_20 = arith.constant 0 : index
    %c0_21 = arith.constant 0 : index
    %45 = vector.load %arg3[%c0_19, %c0_20, %c0_21] : memref<1x8x128xf32, #tpu.memory_space<vmem>>, vector<1x8x128xf32>
    tpu.vector_store %arg3[%c0_19, %c0_20, %c0_21], %44 {strides = array<i32>} : memref<1x8x128xf32, #tpu.memory_space<vmem>>, vector<1x8x128xf32>,
    return
  }
  func.func @transform_0(%arg0: i32) -> (i32, i32, i32) {
    %c0_i32 = arith.constant 0 : i32
    %c0_i32_0 = arith.constant 0 : i32
    %c0_i32_1 = arith.constant 0 : i32
    return %arg0, %c0_i32, %c0_i32_0 : i32, i32, i32
  }
  func.func @transform_1(%arg0: i32) -> (i32, i32, i32, i32) {
    %c0_i32 = arith.constant 0 : i32
    %c0_i32_0 = arith.constant 0 : i32
    %c0_i32_1 = arith.constant 0 : i32
    %c0_i32_2 = arith.constant 0 : i32
    return %arg0, %c0_i32, %c0_i32_0, %c0_i32_1 : i32, i32, i32, i32
  }
  func.func @transform_2(%arg0: i32) -> (i32, i32, i32) {
    %c0_i32 = arith.constant 0 : i32
    %c0_i32_0 = arith.constant 0 : i32
    %c0_i32_1 = arith.constant 0 : i32
    return %arg0, %c0_i32, %c0_i32_0 : i32, i32, i32
  }
}

</mosaic_0001>

<llo_original>
// kernel: tpu_custom_call.1
$region0: #{tpu_custom_call.1}
  #allocation0 [shape = 'u32[]', space=smem, size = 0x4, offset = 0x4, fixed_abs, tag = 'smem constant byte address 0x4 - core index']
  #allocation1 [shape = 'u32[144,128]{1,0:T(1,128)}', space=vmem, size = 0x12000, scoped, tag = 'internal scratch']
  %s0 = inlined_call_operand.hbm [shape: s8[2,2,128], index: 0, kind: input, shape index: {}]
  %s1 = inlined_call_operand.hbm [shape: f32[2,2,2,128], index: 1, kind: input, shape index: {}]
  %s2 = inlined_call_operand.hbm [shape: f32[2,8,128], index: 2, kind: output, shape index: {}]
  %s3 = sld [smem:[#allocation0]]
  $region49: #{tpu_custom_call.1} parent=0
    _
  %s5 = ssub.s32 1, %s3
  %s6 = scalar_select 0, %s5, %s3
  $region1: #{tpu_custom_call.1} parent=0
    #allocation2 [shape = 'u8[1024]{0}', space=vmem, size = 0x400, scoped, tag = 'input window, operand 0']
    #allocation3 [shape = 's32[2]{0}', space=sflag, size = 0x8, scoped, tag = 'scoped memory for tpu_custom_call.1']
    #allocation4 [shape = 's32[2]{0}', space=sflag, size = 0x8, scoped, tag = 'scoped memory for tpu_custom_call.1']
    #allocation5 [shape = 'u8[4096]{0}', space=vmem, size = 0x1000, scoped, tag = 'input window, operand 1']
    #allocation6 [shape = 's32[2]{0}', space=sflag, size = 0x8, scoped, tag = 'scoped memory for tpu_custom_call.1']
    #allocation7 [shape = 'u8[8192]{0}', space=vmem, size = 0x2000, scoped, tag = 'output window, operand 0']
    %7 = vsyncpa [#allocation3], 0
    %s8 = scalar_lea.sflag [#allocation3], 1
    %9 = vsyncpa %s8, 0
    %10 = vsyncpa [#allocation6], 0
    %s11 = scalar_lea.sflag [#allocation6], 1
    %12 = vsyncpa %s11, 0
    %13 = vsyncpa [#allocation4], 0
    %s14 = scalar_lea.sflag [#allocation4], 1
    %15 = vsyncpa %s14, 0
    loop: start=0, step=1, limit=4
    $region2: #{tpu_custom_call.1} parent=1 // loop_pre_header
      _
    $region3: #{tpu_custom_call.1} parent=1 // loop_header
      %s17 = sphi 0, %s21
      %p18 = scmp.ge.s32.totalorder %s17, 4
      %s27 = sphi 0, %s29
      %s30 = sphi 0, %s27
      %s31 = sphi 0, %s30
      %s47 = sphi 0, %s31
      %s53 = sphi 0, %s55
      %s56 = sphi 0, %s53
      %s57 = sphi 0, %s56
      %s73 = sphi 0, %s57
      %s79 = sphi 0, %s81
      %s82 = sphi 0, %s79
      %s83 = sphi 0, %s82
      %s99 = sphi 0, %s83
    $region4: #{tpu_custom_call.1} parent=1 // loop_header_branch
      %20 = sbr.rel (%p18) target = $region8
    $region5: #{tpu_custom_call.1} parent=1 // loop_body
      %s22 = ssub.s32 %s17, 1
      %s23 = ssub.s32 %s17, 2
      %s24 = sadd.s32 %s17, 1
      %s25 = ssub.s32 %s17, %s24
      %p26 = scmp.eq.s32.totalorder %s25, 0
      %s28 = sadd.s32 %s27, 1
      %s29 = scalar_select %p26, %s27, %s28
      %p32 = pneg %p26
      %p33 = scmp.eq.s32.totalorder %s17, 1
      %p34 = por %p32, %p33
      %p35 = scmp.ne.s32.totalorder %s27, %s30
      %p36 = scmp.eq.s32.totalorder %s17, 0
      %p37 = por %p35, %p36
      %p38 = scmp.ne.s32.totalorder %s27, %s30
      %p39 = scmp.eq.s32.totalorder %s22, 1
      %p40 = por %p38, %p39
      %p41 = scmp.ne.s32.totalorder %s30, %s31
      %p42 = scmp.eq.s32.totalorder %s22, 0
      %p43 = por %p41, %p42
      %p44 = scmp.ne.s32.totalorder %s30, %s31
      %p45 = scmp.eq.s32.totalorder %s23, 1
      %p46 = por %p44, %p45
      %p48 = scmp.ne.s32.totalorder %s31, %s47
      %p49 = scmp.eq.s32.totalorder %s23, 0
      %p50 = por %p48, %p49
      %s51 = ssub.s32 %s17, %s24
      %p52 = scmp.eq.s32.totalorder %s51, 0
      %s54 = sadd.s32 %s53, 1
      %s55 = scalar_select %p52, %s53, %s54
      %p58 = pneg %p52
      %p59 = scmp.eq.s32.totalorder %s17, 1
      %p60 = por %p58, %p59
      %p61 = scmp.ne.s32.totalorder %s53, %s56
      %p62 = scmp.eq.s32.totalorder %s17, 0
      %p63 = por %p61, %p62
      %p64 = scmp.ne.s32.totalorder %s53, %s56
      %p65 = scmp.eq.s32.totalorder %s22, 1
      %p66 = por %p64, %p65
      %p67 = scmp.ne.s32.totalorder %s56, %s57
      %p68 = scmp.eq.s32.totalorder %s22, 0
      %p69 = por %p67, %p68
      %p70 = scmp.ne.s32.totalorder %s56, %s57
      %p71 = scmp.eq.s32.totalorder %s23, 1
      %p72 = por %p70, %p71
      %p74 = scmp.ne.s32.totalorder %s57, %s73
      %p75 = scmp.eq.s32.totalorder %s23, 0
      %p76 = por %p74, %p75
      %s77 = ssub.s32 %s17, %s24
      %p78 = scmp.eq.s32.totalorder %s77, 0
      %s80 = sadd.s32 %s79, 1
      %s81 = scalar_select %p78, %s79, %s80
      %p84 = pneg %p78
      %p85 = scmp.eq.s32.totalorder %s17, 1
      %p86 = por %p84, %p85
      %p87 = scmp.ne.s32.totalorder %s79, %s82
      %p88 = scmp.eq.s32.totalorder %s17, 0
      %p89 = por %p87, %p88
      %p90 = scmp.ne.s32.totalorder %s79, %s82
      %p91 = scmp.eq.s32.totalorder %s22, 1
      %p92 = por %p90, %p91
      %p93 = scmp.ne.s32.totalorder %s82, %s83
      %p94 = scmp.eq.s32.totalorder %s22, 0
      %p95 = por %p93, %p94
      %p96 = scmp.ne.s32.totalorder %s82, %s83
      %p97 = scmp.eq.s32.totalorder %s23, 1
      %p98 = por %p96, %p97
      %p100 = scmp.ne.s32.totalorder %s83, %s99
      %p101 = scmp.eq.s32.totalorder %s23, 0
      %p102 = por %p100, %p101
      %p103 = scmp.le.s32.totalorder 1, %s17
      %p104 = scmp.lt.s32.totalorder %s17, 3
      %p105 = pnand %p103, %p104
      %p106 = pneg %p105
      // Predicated region
      $region9: #{tpu_custom_call.1} parent=5 // pred_check
        _
      $region10: #{tpu_custom_call.1} parent=5 // pred_check_branch
        %108 = sbr.rel (%p105) target = $region12
      $region11: #{tpu_custom_call.1} parent=5 // pred_region
        %s109 = ssub.s32 %s17, 1
      $region12: #{tpu_custom_call.1} parent=5 // pred_fallthru
        _
      %p110 = scmp.lt.s32.totalorder %s17, 2
      // Predicated region
      $region13: #{tpu_custom_call.1} parent=5 // pred_check
        %p111 = pneg %p110
      $region14: #{tpu_custom_call.1} parent=5 // pred_check_branch
        %113 = sbr.rel (%p111) target = $region16
      $region15: #{tpu_custom_call.1} parent=5 // pred_region
        // Predicated region
        $region17: #{tpu_custom_call.1} parent=15 // pred_check
          %p114 = pneg %p37
        $region18: #{tpu_custom_call.1} parent=15 // pred_check_branch
          %116 = sbr.rel (%p114) target = $region20
        $region19: #{tpu_custom_call.1} parent=15 // pred_region
          %s117 = sand.u32 %s27, 1
          %s118 = scalar_lea.sflag [#allocation3], %s117
          %s119 = sand.u32 %s27, 1
          %s120 = scalar_lea.vmem [#allocation2], %s119
          %s122 = ssub.s32 16, 16
          %123 = vsyncadd %s118, %s122
          %s124 = smul.addr %s17, 16
          %s125 = scalar_lea.hbm %s0, %s124
          %s127 = sshll.u32 %s120, 4
          %s128 = int_to_ptr.vmem [resolvable:$true] %s127
          %130 = dma.hbm_to_vmem [thread:$0]  %s125, 16, %s128, %s118
        $region20: #{tpu_custom_call.1} parent=15 // pred_fallthru
          _
        // Predicated region
        $region21: #{tpu_custom_call.1} parent=15 // pred_check
          %p131 = pneg %p63
        $region22: #{tpu_custom_call.1} parent=15 // pred_check_branch
          %133 = sbr.rel (%p131) target = $region24
        $region23: #{tpu_custom_call.1} parent=15 // pred_region
          %s134 = sand.u32 %s53, 1
          %s135 = scalar_lea.sflag [#allocation6], %s134
          %s136 = sand.u32 %s53, 1
          %s137 = smul.addr %s136, 4
          %s138 = scalar_lea.vmem [#allocation5], %s137
          %s140 = ssub.s32 64, 64
          %141 = vsyncadd %s135, %s140
          %s142 = smul.addr %s17, 2
          %s143 = smul.addr %s142, 32
          %s144 = scalar_lea.hbm %s1, %s143
          %s145 = sshll.u32 %s138, 4
          %s146 = int_to_ptr.vmem [resolvable:$true] %s145
          %151 = dma.hbm_to_vmem [thread:$0]  %s144, 64, %s146, %s135, 32, 32, 2
        $region24: #{tpu_custom_call.1} parent=15 // pred_fallthru
          _
      $region16: #{tpu_custom_call.1} parent=5 // pred_fallthru
        _
      %p152 = scmp.le.s32.totalorder 1, %s17
      %p153 = scmp.lt.s32.totalorder %s17, 3
      %p154 = pnand %p152, %p153
      %p155 = pneg %p154
      // Predicated region
      $region25: #{tpu_custom_call.1} parent=5 // pred_check
        _
      $region26: #{tpu_custom_call.1} parent=5 // pred_check_branch
        %157 = sbr.rel (%p154) target = $region28
      $region27: #{tpu_custom_call.1} parent=5 // pred_region
        %s158 = ssub.s32 %s17, 1
        %s159 = sand.u32 %s30, 1
        %s160 = scalar_lea.sflag [#allocation3], %s159
        %s161 = sand.u32 %s30, 1
        %s162 = scalar_lea.vmem [#allocation2], %s161
        // Predicated region
        $region29: #{tpu_custom_call.1} parent=27 // pred_check
          %p163 = pneg %p43
        $region30: #{tpu_custom_call.1} parent=27 // pred_check_branch
          %165 = sbr.rel (%p163) target = $region32
        $region31: #{tpu_custom_call.1} parent=27 // pred_region
          %166 = dma.done %s160, 16
        $region32: #{tpu_custom_call.1} parent=27 // pred_fallthru
          _
        %s167 = sand.u32 %s56, 1
        %s168 = scalar_lea.sflag [#allocation6], %s167
        %s169 = sand.u32 %s56, 1
        %s170 = smul.addr %s169, 4
        %s171 = scalar_lea.vmem [#allocation5], %s170
        // Predicated region
        $region33: #{tpu_custom_call.1} parent=27 // pred_check
          %p172 = pneg %p69
        $region34: #{tpu_custom_call.1} parent=27 // pred_check_branch
          %174 = sbr.rel (%p172) target = $region36
        $region35: #{tpu_custom_call.1} parent=27 // pred_region
          %175 = dma.done %s168, 64
        $region36: #{tpu_custom_call.1} parent=27 // pred_fallthru
          _
        %s176 = sand.u32 %s30, 1
        %s177 = scalar_lea.sflag [#allocation3], %s176
        %s178 = sand.u32 %s30, 1
        %s179 = scalar_lea.vmem [#allocation2], %s178
        %p180 = pneg %p43
        %p181 = pneg %p40
        %s182 = sand.u32 %s56, 1
        %s183 = scalar_lea.sflag [#allocation6], %s182
        %s184 = sand.u32 %s56, 1
        %s185 = smul.addr %s184, 4
        %s186 = scalar_lea.vmem [#allocation5], %s185
        %p187 = pneg %p69
        %p188 = pneg %p66
        %p189 = pneg %p95
        %p190 = pneg %p92
        %s191 = sand.u32 %s82, 1
        %s192 = scalar_lea.sflag [#allocation4], %s191
        %s193 = sand.u32 %s82, 1
        %s194 = smul.addr %s193, 8
        %s195 = scalar_lea.vmem [#allocation7], %s194
        %v196 = vld [vmem:[%s171] sm:$0x3]
        %s197 = scalar_lea.vmem %s171, 2 [#allocation5]
        %v198 = vld [vmem:[%s197] sm:$0x3]
        %v199 = vld [vmem:[%s162] sm:$0x1]
        %v200 = vunpack.c.0.s8 %v199
        %vm201 = vcmp.eq.s32.totalorder %v200, 1
        %v202 = vsub.f32 %v196, %v198
        %v203 = vsub.f32 %v198, %v196
        %v204 = vsel %vm201, %v202, %v203
        %v205 = vand.u32 2147483647, %v204
        %v206 = vsub.f32 0.0, %v205
        %v207 = vmul.f32 %v206, 1.442695
        %v208 = vpow.pop %v207
        %v209 = vmax.f32 %v204, 0.0
        %v210 = vadd.f32 %v208, 1.0
        %v211 = vlog2.pop %v210
        %v212 = vmul.f32 %v211, 0.6931472
        %v213 = vadd.f32 %v209, %v212
        %v214 = vsub.f32 0.0, %v213
        %vm215 = vcmp.ge.f32.partialorder %v204, 0.0
        %v216 = vsel %vm215, 1.0, %v208
        %v217 = vrcp.pop %v210
        %v218 = vmul.f32 %v216, %v217
        %v219 = vsel %vm201, 0.936216, 0.063784
        %v220 = vmul.f32 %v218, %v218
        %v221 = vsub.f32 0.0, %v220
        %v222 = vmul.f32 %v214, %v219
        %v223 = vmul.f32 %v221, %v222
        %vm224 = vcmask 1041408
        %v225 = vsel %vm224, %v223, 0.0
        %226 = vadd.xlane.f32.xlu0 %v225
        %v227 = vpop.xlane.xlu0 %226
        %v228 = vrot.slane %v227, 4
        %v229 = vadd.f32 %v227, %v228
        %v230 = vrot.slane %v229, 2
        %v231 = vadd.f32 %v229, %v230
        %v232 = vrot.slane %v231, 1
        %v233 = vadd.f32 %v231, %v232
        %s234 = vtos %v233
        %v235 = vstv %s234
        %236 = vst [vmem:[%s195] sm:$0xff] %v235
        %s237 = sand.u32 %s82, 1
        %s238 = scalar_lea.sflag [#allocation4], %s237
        %s239 = sand.u32 %s82, 1
        %s240 = smul.addr %s239, 8
        %s241 = scalar_lea.vmem [#allocation7], %s240
        // Predicated region
        $region37: #{tpu_custom_call.1} parent=27 // pred_check
          %p242 = pneg %p92
        $region38: #{tpu_custom_call.1} parent=27 // pred_check_branch
          %244 = sbr.rel (%p242) target = $region40
        $region39: #{tpu_custom_call.1} parent=27 // pred_region
          %s246 = ssub.s32 128, 128
          %247 = vsyncadd %s238, %s246
          %s248 = smul.addr %s22, 128
          %s249 = scalar_lea.hbm %s2, %s248
          %s251 = sshll.u32 %s241, 4
          %s252 = int_to_ptr.vmem [resolvable:$true] %s251
          %254 = dma.vmem_to_hbm [thread:$0]  %s252, 128, %s249, %s238
        $region40: #{tpu_custom_call.1} parent=27 // pred_fallthru
          _
      $region28: #{tpu_custom_call.1} parent=5 // pred_fallthru
        _
      %p255 = scmp.le.s32.totalorder 2, %s17
      // Predicated region
      $region41: #{tpu_custom_call.1} parent=5 // pred_check
        %p256 = pneg %p255
      $region42: #{tpu_custom_call.1} parent=5 // pred_check_branch
        %258 = sbr.rel (%p256) target = $region44
      $region43: #{tpu_custom_call.1} parent=5 // pred_region
        %s259 = ssub.s32 %s17, 2
        // Predicated region
        $region45: #{tpu_custom_call.1} parent=43 // pred_check
          %p260 = pneg %p98
        $region46: #{tpu_custom_call.1} parent=43 // pred_check_branch
          %262 = sbr.rel (%p260) target = $region48
        $region47: #{tpu_custom_call.1} parent=43 // pred_region
          %s263 = sand.u32 %s83, 1
          %s264 = scalar_lea.sflag [#allocation4], %s263
          %s265 = sand.u32 %s83, 1
          %s266 = smul.addr %s265, 8
          %s267 = scalar_lea.vmem [#allocation7], %s266
          %268 = dma.done %s264, 128
        $region48: #{tpu_custom_call.1} parent=43 // pred_fallthru
          _
      $region44: #{tpu_custom_call.1} parent=5 // pred_fallthru
        _
    $region6: #{tpu_custom_call.1} parent=1 // loop_footer
      %s21 = sadd.s32 1, %s17
    $region7: #{tpu_custom_call.1} parent=1 // loop_footer_branch
      %16 = sbr.rel target = $region3
    $region8: #{tpu_custom_call.1} parent=1 // loop_exit
      _
    %269 = vsyncpa [#allocation3], 1
    %s270 = scalar_lea.sflag [#allocation3], 1
    %271 = vsyncpa %s270, 1
    %272 = vsyncpa [#allocation6], 1
    %s273 = scalar_lea.sflag [#allocation6], 1
    %274 = vsyncpa %s273, 1
    %275 = vsyncpa [#allocation4], 1
    %s276 = scalar_lea.sflag [#allocation4], 1
    %277 = vsyncpa %s276, 1

</llo_original>
